<compile_context>
chip_gen: v6e
topology: v6e:2x2x1
jax: 0.10.0
libtpu: 0.0.40
codegen_flags: <defaults>
</compile_context>

<pallas_src>
import jax
import jax.numpy as jnp
from jax.experimental import pallas as pl
from jax.experimental.pallas import tpu as pltpu


# ----------------------------- Pallas kernel -------------------------------

def _make_decomposition_kernel(child_num, hidden_dim):
    """Kernel for a fixed (child_num, hidden_dim); children unrolled at trace time."""
    K, C = child_num, hidden_dim

    def kernel(*refs):
        parent_ref, patt_ref = refs[0], refs[1]
        child_refs = refs[2:2 + K]
        const_ref = refs[2 + K]
        dm_ref = refs[3 + K]            # (K, THW)
        y_ref = refs[4 + K]             # (K, C, THW) stacked child outputs

        # --- constants: one packed buffer, static slices (single DMA stream) ---
        consts = const_ref[...]                               # (K+C, cols)
        w_att_p = consts[0:K, 0:C]                             # (K, C)
        b_att = consts[0:K, (K + 1) * C:(K + 1) * C + 1]       # (K, 1)
        w_rel_child = consts[K:K + C, 0:C]                     # (C, C)  BN scale folded
        w_rel_gate = consts[K:K + C, C:2 * C]                  # (C, C)  BN scale folded
        bn_shift = consts[K:K + C, 2 * C:2 * C + 1]            # (C, 1)

        # --- activations: load each tile exactly once (hoisted) ---
        parent = parent_ref[...]                               # (C, THW)
        patt = patt_ref[...]                                   # (1, THW)
        children = [child_refs[i][...] for i in range(K)]

        # --- decomp_att 1x1 conv: split-weight channels-major matmuls ---
        dm = jnp.dot(w_att_p, parent, preferred_element_type=jnp.float32)
        for i in range(K):
            w_att_ci = consts[0:K, C * (1 + i):C * (2 + i)]    # (K, C)
            dm = dm + jnp.dot(w_att_ci, children[i],
                              preferred_element_type=jnp.float32)
        dm = dm + b_att                                        # lane-broadcast bias
        dm_ref[...] = dm.astype(dm_ref.dtype)

        # --- softmax over the child axis (sublanes, size K) ---
        mx = jnp.max(dm, axis=0, keepdims=True)
        e = jnp.exp(dm - mx)
        inv = pl.reciprocal(jnp.sum(e, axis=0, keepdims=True), approx=False)
        att = e * inv                                          # (K, THW)

        # --- relation conv per child: gated 1x1 conv + folded BN + ReLU ---
        for i in range(K):
            g = patt * att[i:i + 1, :]                         # (1, THW) row product
            gated = parent * g                                 # (C, THW)
            y = jnp.dot(w_rel_child, children[i],
                        preferred_element_type=jnp.float32)
            y = y + jnp.dot(w_rel_gate, gated,
                            preferred_element_type=jnp.float32)
            y = y + bn_shift                                   # BN scale already folded
            y_ref[i] = jnp.maximum(y, 0.0).astype(y_ref.dtype)

    return kernel


# ------------------------------ wrapper -------------------------------------

def _choose_tile_hw(HW, N, C, K, itemsize, vmem_act_budget_bytes):
    """Largest tile that fits the (double-buffered) activation VMEM budget."""
    # per-pixel bytes: inputs (parent C + patt 1 + children K*C) + outputs (map K + K*C)
    per_pixel = 2 * itemsize * ((K + 1) * C + 1 + K + K * C)   # x2: double buffering
    max_pix = max(128, vmem_act_budget_bytes // per_pixel)
    if max_pix >= HW:
        tile = HW
    else:
        tile = max(128, (max_pix // 128) * 128)
        while tile > 128 and HW % tile != 0:                   # keep a clean divisor
            tile -= 128
    # Megacore (v7x: 2 TensorCores/chip): guarantee >= 2 parallel grid steps.
    if N * max(HW // tile, 1) < 2 and HW % 256 == 0:
        tile = min(tile, HW // 2)
    return tile


def decomposition_forward(parent, child_list, parent_att, params, *, tile_hw=None,
                          vmem_act_budget_bytes=24 << 20):
    """parent/child_i: (N, C, H, W); parent_att: (N, 1, H, W).

    Returns ([ (N, C, H, W) ] * child_num, (N, child_num, H, W))."""
    N, C, H, W = parent.shape
    K = len(child_list)
    HW = H * W
    itemsize = jnp.dtype(parent.dtype).itemsize

    if tile_hw is None:
        tile_hw = _choose_tile_hw(HW, N, C, K, itemsize, vmem_act_budget_bytes)
    assert HW % tile_hw == 0 and (tile_hw == HW or tile_hw % 128 == 0), \
        "tile_hw must divide H*W and be a multiple of 128 (or the full image)"
    n_hw = HW // tile_hw

    # NCHW -> (N, C, H*W): free reshape; channels on sublanes, pixels on lanes.
    parent_f = parent.reshape(N, C, HW)
    patt_f = parent_att.reshape(N, 1, HW)
    children_f = [c.reshape(N, C, HW) for c in child_list]
    consts = params["packed_consts"]

    act_spec = pl.BlockSpec((None, C, tile_hw), lambda n, t: (n, 0, t))
    patt_spec = pl.BlockSpec((None, 1, tile_hw), lambda n, t: (n, 0, t))
    const_spec = pl.BlockSpec(consts.shape, lambda n, t: (0, 0))   # grid-invariant

    in_specs = [act_spec, patt_spec] + [act_spec] * K + [const_spec]
    out_specs = [
        pl.BlockSpec((None, K, tile_hw), lambda n, t: (n, 0, t)),
        pl.BlockSpec((None, K, C, tile_hw), lambda n, t: (n, 0, 0, t)),
    ]
    out_shape = (
        jax.ShapeDtypeStruct((N, K, HW), parent.dtype),
        jax.ShapeDtypeStruct((N, K, C, HW), parent.dtype),
    )

    dm_flat, y_flat = pl.pallas_call(
        _make_decomposition_kernel(K, C),
        out_shape=out_shape,
        grid_spec=pltpu.PrefetchScalarGridSpec(
            num_scalar_prefetch=0,
            grid=(N, n_hw),
            in_specs=in_specs,
            out_specs=out_specs,
        ),
        compiler_params=pltpu.CompilerParams(
            dimension_semantics=("parallel", "parallel"),
            vmem_limit_bytes=32 << 20,
        ),
    )(parent_f, patt_f, *children_f, consts)

    decomp_map = dm_flat.reshape(N, K, H, W)
    y = y_flat.reshape(N, K, C, H, W)
    decomp_list = [y[:, i] for i in range(K)]
    return decomp_list, decomp_map


# ------------------------ deterministic parameters --------------------------

def make_params(hidden_dim=10, child_num=2, eps=1e-5):
    C, K = hidden_dim, child_num
    key = jax.random.PRNGKey(0)
    k_wa, k_ba, k_wr, k_g, k_b, k_m, k_v = jax.random.split(key, 7)

    # decomp_att: Conv2d((K+1)*C -> K, k=1, bias=True)
    w_att = 0.1 * jax.random.normal(k_wa, (K, (K + 1) * C), jnp.float32)
    b_att = 0.05 * jax.random.normal(k_ba, (K,), jnp.float32)
    # relation: Conv2d(2C -> C, k=1, bias=False)
    w_rel = 0.1 * jax.random.normal(k_wr, (C, 2 * C), jnp.float32)
    # BatchNorm2d(C) (eval mode) deterministic stats/affine
    gamma = 1.0 + 0.1 * jax.random.normal(k_g, (C,), jnp.float32)
    beta = 0.05 * jax.random.normal(k_b, (C,), jnp.float32)
    running_mean = 0.1 * jax.random.normal(k_m, (C,), jnp.float32)
    running_var = 1.0 + 0.1 * jax.random.uniform(k_v, (C,), jnp.float32)

    inv_std = 1.0 / jnp.sqrt(running_var + eps)
    bn_scale = gamma * inv_std                    # (C,)
    bn_shift = beta - running_mean * bn_scale     # (C,)
    w_rel_scaled = w_rel * bn_scale[:, None]      # fold BN scale into conv rows

    # Pack ALL kernel-side constants into one small padded buffer:
    #   rows [0, K)   : [ w_att (K, (K+1)C) | b_att (K, 1) | pad ]
    #   rows [K, K+C) : [ w_rel_scaled (C, 2C) | bn_shift (C, 1) | pad ]
    rows = K + C
    cols = max((K + 1) * C + 1, 2 * C + 1)
    packed = jnp.zeros((rows, cols), jnp.float32)
    packed = packed.at[0:K, 0:(K + 1) * C].set(w_att)
    packed = packed.at[0:K, (K + 1) * C].set(b_att)
    packed = packed.at[K:K + C, 0:2 * C].set(w_rel_scaled)
    packed = packed.at[K:K + C, 2 * C].set(bn_shift)

    return {
        # raw (for the reference)
        "w_att": w_att, "b_att": b_att, "w_rel": w_rel,
        "gamma": gamma, "beta": beta,
        "running_mean": running_mean, "running_var": running_var, "eps": eps,
        # kernel-side (pre-split, BN-folded, packed into one buffer)
        "packed_consts": packed,
    }


# ------------------------------ reference ----------------------------------

def decomposition_reference(parent, child_list, parent_att, params):
    x = jnp.concatenate([parent] + list(child_list), axis=1)       # (N, (K+1)C, H, W)
    decomp_map = (jnp.einsum("nchw,oc->nohw", x, params["w_att"])
                  + params["b_att"].reshape(1, -1, 1, 1))
    decomp_att = jax.nn.softmax(decomp_map, axis=1)

    mean = params["running_mean"].reshape(1, -1, 1, 1)
    var = params["running_var"].reshape(1, -1, 1, 1)
    gamma = params["gamma"].reshape(1, -1, 1, 1)
    beta = params["beta"].reshape(1, -1, 1, 1)

    outs = []
    for i in range(len(child_list)):
        gate = parent * decomp_att[:, i:i + 1] * parent_att
        xi = jnp.concatenate([child_list[i], gate], axis=1)        # (N, 2C, H, W)
        y = jnp.einsum("nchw,oc->nohw", xi, params["w_rel"])
        y = (y - mean) / jnp.sqrt(var + params["eps"]) * gamma + beta
        outs.append(jnp.maximum(y, 0.0))
    return outs, decomp_map


# -------------------------------- main --------------------------------------

if __name__ == "__main__":
    N, C, H, W = 2, 10, 16, 16          # hidden_dim=10, child_num=2 (module defaults)
    child_num = 2

    key = jax.random.PRNGKey(0)
    k1, k2, k3 = jax.random.split(key, 3)
    parent = jax.random.normal(k1, (N, C, H, W), jnp.float32)
    child_list = [jax.random.normal(k, (N, C, H, W), jnp.float32)
                  for k in jax.random.split(k2, child_num)]
    parent_att = jax.random.uniform(k3, (N, 1, H, W), jnp.float32)

    params = make_params(hidden_dim=C, child_num=child_num)

    decomp_list, decomp_map = decomposition_forward(parent, child_list, parent_att, params)
    decomp_list = [jax.block_until_ready(y) for y in decomp_list]
    decomp_map = jax.block_until_ready(decomp_map)

    ref_list, ref_map = decomposition_reference(parent, child_list, parent_att, params)

    assert decomp_map.shape == (N, child_num, H, W)
    assert jnp.allclose(decomp_map, ref_map, atol=1e-4, rtol=1e-4), "decomp_map mismatch"
    for y, r in zip(decomp_list, ref_list):
        assert y.shape == (N, C, H, W)
        assert jnp.allclose(y, r, atol=1e-4, rtol=1e-4), "decomp output mismatch"

    print("KERNEL_OK")
</pallas_src>

<mosaic_0001>
module attributes {stable_mosaic.version = 11 : i64} {
  func.func @kernel(%arg0: i32, %arg1: i32, %arg2: memref<1x10x256xf32, #tpu.memory_space<vmem>>, %arg3: memref<1x1x256xf32, #tpu.memory_space<vmem>>, %arg4: memref<1x10x256xf32, #tpu.memory_space<vmem>>, %arg5: memref<1x10x256xf32, #tpu.memory_space<vmem>>, %arg6: memref<12x31xf32, #tpu.memory_space<vmem>>, %arg7: memref<1x2x256xf32, #tpu.memory_space<vmem>>, %arg8: memref<1x2x10x256xf32, #tpu.memory_space<vmem>>) attributes {dimension_semantics = [#tpu.dimension_semantics<parallel>, #tpu.dimension_semantics<parallel>], iteration_bounds = array<i64: 2, 1>, scalar_prefetch = 0 : i64, scratch_operands = 0 : i64, tpu.core_type = #tpu.core_type<tc>, window_params = [{transform_indices = @transform_0, window_bounds = array<i64: 1, 10, 256>}, {transform_indices = @transform_1, window_bounds = array<i64: 1, 1, 256>}, {transform_indices = @transform_2, window_bounds = array<i64: 1, 10, 256>}, {transform_indices = @transform_3, window_bounds = array<i64: 1, 10, 256>}, {pipeline_mode = #tpu.pipeline_mode<synchronous>, transform_indices = @transform_4, window_bounds = array<i64: 12, 31>}, {transform_indices = @transform_5, window_bounds = array<i64: 1, 2, 256>}, {transform_indices = @transform_6, window_bounds = array<i64: 1, 2, 10, 256>}]} {
    %c0 = arith.constant 0 : index
    %c0_0 = arith.constant 0 : index
    %0 = vector.load %arg6[%c0, %c0_0] : memref<12x31xf32, #tpu.memory_space<vmem>>, vector<12x31xf32>
    %1 = vector.extract_strided_slice %0 {offsets = [0, 0], sizes = [2, 10], strides = [1, 1]} : vector<12x31xf32> to vector<2x10xf32>
    %2 = vector.extract_strided_slice %0 {offsets = [0, 30], sizes = [2, 1], strides = [1, 1]} : vector<12x31xf32> to vector<2x1xf32>
    %3 = vector.extract_strided_slice %0 {offsets = [2, 0], sizes = [10, 10], strides = [1, 1]} : vector<12x31xf32> to vector<10x10xf32>
    %4 = vector.extract_strided_slice %0 {offsets = [2, 10], sizes = [10, 10], strides = [1, 1]} : vector<12x31xf32> to vector<10x10xf32>
    %5 = vector.extract_strided_slice %0 {offsets = [2, 20], sizes = [10, 1], strides = [1, 1]} : vector<12x31xf32> to vector<10x1xf32>
    %c0_1 = arith.constant 0 : index
    %c0_2 = arith.constant 0 : index
    %c0_3 = arith.constant 0 : index
    %6 = vector.load %arg2[%c0_1, %c0_2, %c0_3] : memref<1x10x256xf32, #tpu.memory_space<vmem>>, vector<1x10x256xf32>
    %7 = vector.shape_cast %6 : vector<1x10x256xf32> to vector<10x256xf32>
    %c0_4 = arith.constant 0 : index
    %c0_5 = arith.constant 0 : index
    %c0_6 = arith.constant 0 : index
    %8 = vector.load %arg3[%c0_4, %c0_5, %c0_6] : memref<1x1x256xf32, #tpu.memory_space<vmem>>, vector<1x1x256xf32>
    %9 = vector.shape_cast %8 : vector<1x1x256xf32> to vector<1x256xf32>
    %c0_7 = arith.constant 0 : index
    %c0_8 = arith.constant 0 : index
    %c0_9 = arith.constant 0 : index
    %10 = vector.load %arg4[%c0_7, %c0_8, %c0_9] : memref<1x10x256xf32, #tpu.memory_space<vmem>>, vector<1x10x256xf32>
    %11 = vector.shape_cast %10 : vector<1x10x256xf32> to vector<10x256xf32>
    %c0_10 = arith.constant 0 : index
    %c0_11 = arith.constant 0 : index
    %c0_12 = arith.constant 0 : index
    %12 = vector.load %arg5[%c0_10, %c0_11, %c0_12] : memref<1x10x256xf32, #tpu.memory_space<vmem>>, vector<1x10x256xf32>
    %13 = vector.shape_cast %12 : vector<1x10x256xf32> to vector<10x256xf32>
    %cst = arith.constant dense<0.000000e+00> : vector<2x256xf32>
    %14 = tpu.matmul %1, %7, %cst {dimension_numbers = #tpu.dot_dimension_numbers<[1], [0], [0], [1], [0, 0, 1, 1], [], []>} : vector<2x10xf32>, vector<10x256xf32>, vector<2x256xf32> -> vector<2x256xf32>
    %15 = vector.extract_strided_slice %0 {offsets = [0, 10], sizes = [2, 10], strides = [1, 1]} : vector<12x31xf32> to vector<2x10xf32>
    %cst_13 = arith.constant dense<0.000000e+00> : vector<2x256xf32>
    %16 = tpu.matmul %15, %11, %cst_13 {dimension_numbers = #tpu.dot_dimension_numbers<[1], [0], [0], [1], [0, 0, 1, 1], [], []>} : vector<2x10xf32>, vector<10x256xf32>, vector<2x256xf32> -> vector<2x256xf32>
    %17 = arith.addf %14, %16 : vector<2x256xf32>
    %18 = vector.extract_strided_slice %0 {offsets = [0, 20], sizes = [2, 10], strides = [1, 1]} : vector<12x31xf32> to vector<2x10xf32>
    %cst_14 = arith.constant dense<0.000000e+00> : vector<2x256xf32>
    %19 = tpu.matmul %18, %13, %cst_14 {dimension_numbers = #tpu.dot_dimension_numbers<[1], [0], [0], [1], [0, 0, 1, 1], [], []>} : vector<2x10xf32>, vector<10x256xf32>, vector<2x256xf32> -> vector<2x256xf32>
    %20 = arith.addf %17, %19 : vector<2x256xf32>
    %21 = vector.broadcast %2 : vector<2x1xf32> to vector<2x256xf32>
    %22 = arith.addf %20, %21 : vector<2x256xf32>
    %c0_15 = arith.constant 0 : index
    %c0_16 = arith.constant 0 : index
    %c0_17 = arith.constant 0 : index
    %23 = vector.load %arg7[%c0_15, %c0_16, %c0_17] : memref<1x2x256xf32, #tpu.memory_space<vmem>>, vector<1x2x256xf32>
    %24 = vector.shape_cast %23 : vector<1x2x256xf32> to vector<2x256xf32>
    %25 = vector.shape_cast %22 : vector<2x256xf32> to vector<1x2x256xf32>
    tpu.vector_store %arg7[%c0_15, %c0_16, %c0_17], %25 {strides = array<i32>} : memref<1x2x256xf32, #tpu.memory_space<vmem>>, vector<1x2x256xf32>,
    %cst_18 = arith.constant dense<0xFF800000> : vector<256xf32>
    %26 = vector.multi_reduction <maximumf>, %22, %cst_18 [0] : vector<2x256xf32> to vector<256xf32>
    %27 = vector.shape_cast %26 : vector<256xf32> to vector<1x256xf32>
    %28 = vector.broadcast %27 : vector<1x256xf32> to vector<2x256xf32>
    %29 = arith.subf %22, %28 : vector<2x256xf32>
    %30 = math.exp %29 : vector<2x256xf32>
    %cst_19 = arith.constant dense<0.000000e+00> : vector<256xf32>
    %31 = vector.multi_reduction <add>, %30, %cst_19 [0] : vector<2x256xf32> to vector<256xf32>
    %32 = vector.shape_cast %31 : vector<256xf32> to vector<1x256xf32>
    %33 = tpu.reciprocal %32 : vector<1x256xf32> -> vector<1x256xf32>
    %34 = vector.broadcast %33 : vector<1x256xf32> to vector<2x256xf32>
    %35 = arith.mulf %30, %34 : vector<2x256xf32>
    %36 = vector.extract_strided_slice %35 {offsets = [0, 0], sizes = [1, 256], strides = [1, 1]} : vector<2x256xf32> to vector<1x256xf32>
    %37 = arith.mulf %9, %36 : vector<1x256xf32>
    %38 = vector.broadcast %37 : vector<1x256xf32> to vector<10x256xf32>
    %39 = arith.mulf %7, %38 : vector<10x256xf32>
    %cst_20 = arith.constant dense<0.000000e+00> : vector<10x256xf32>
    %40 = tpu.matmul %3, %11, %cst_20 {dimension_numbers = #tpu.dot_dimension_numbers<[1], [0], [0], [1], [0, 0, 1, 1], [], []>} : vector<10x10xf32>, vector<10x256xf32>, vector<10x256xf32> -> vector<10x256xf32>
    %cst_21 = arith.constant dense<0.000000e+00> : vector<10x256xf32>
    %41 = tpu.matmul %4, %39, %cst_21 {dimension_numbers = #tpu.dot_dimension_numbers<[1], [0], [0], [1], [0, 0, 1, 1], [], []>} : vector<10x10xf32>, vector<10x256xf32>, vector<10x256xf32> -> vector<10x256xf32>
    %42 = arith.addf %40, %41 : vector<10x256xf32>
    %43 = vector.broadcast %5 : vector<10x1xf32> to vector<10x256xf32>
    %44 = arith.addf %42, %43 : vector<10x256xf32>
    %cst_22 = arith.constant 0.000000e+00 : f32
    %45 = vector.broadcast %cst_22 : f32 to vector<10x256xf32>
    %46 = arith.maximumf %44, %45 : vector<10x256xf32>
    %c0_23 = arith.constant 0 : index
    %c0_24 = arith.constant 0 : index
    %c0_25 = arith.constant 0 : index
    %c0_26 = arith.constant 0 : index
    %47 = vector.load %arg8[%c0_23, %c0_24, %c0_25, %c0_26] : memref<1x2x10x256xf32, #tpu.memory_space<vmem>>, vector<1x1x10x256xf32>
    %48 = vector.shape_cast %47 : vector<1x1x10x256xf32> to vector<10x256xf32>
    %49 = vector.shape_cast %46 : vector<10x256xf32> to vector<1x1x10x256xf32>
    tpu.vector_store %arg8[%c0_23, %c0_24, %c0_25, %c0_26], %49 {strides = array<i32>} : memref<1x2x10x256xf32, #tpu.memory_space<vmem>>, vector<1x1x10x256xf32>,
    %50 = vector.extract_strided_slice %35 {offsets = [1, 0], sizes = [1, 256], strides = [1, 1]} : vector<2x256xf32> to vector<1x256xf32>
    %51 = arith.mulf %9, %50 : vector<1x256xf32>
    %52 = vector.broadcast %51 : vector<1x256xf32> to vector<10x256xf32>
    %53 = arith.mulf %7, %52 : vector<10x256xf32>
    %cst_27 = arith.constant dense<0.000000e+00> : vector<10x256xf32>
    %54 = tpu.matmul %3, %13, %cst_27 {dimension_numbers = #tpu.dot_dimension_numbers<[1], [0], [0], [1], [0, 0, 1, 1], [], []>} : vector<10x10xf32>, vector<10x256xf32>, vector<10x256xf32> -> vector<10x256xf32>
    %cst_28 = arith.constant dense<0.000000e+00> : vector<10x256xf32>
    %55 = tpu.matmul %4, %53, %cst_28 {dimension_numbers = #tpu.dot_dimension_numbers<[1], [0], [0], [1], [0, 0, 1, 1], [], []>} : vector<10x10xf32>, vector<10x256xf32>, vector<10x256xf32> -> vector<10x256xf32>
    %56 = arith.addf %54, %55 : vector<10x256xf32>
    %57 = vector.broadcast %5 : vector<10x1xf32> to vector<10x256xf32>
    %58 = arith.addf %56, %57 : vector<10x256xf32>
    %cst_29 = arith.constant 0.000000e+00 : f32
    %59 = vector.broadcast %cst_29 : f32 to vector<10x256xf32>
    %60 = arith.maximumf %58, %59 : vector<10x256xf32>
    %c0_30 = arith.constant 0 : index
    %c1 = arith.constant 1 : index
    %c0_31 = arith.constant 0 : index
    %c0_32 = arith.constant 0 : index
    %61 = vector.load %arg8[%c0_30, %c1, %c0_31, %c0_32] : memref<1x2x10x256xf32, #tpu.memory_space<vmem>>, vector<1x1x10x256xf32>
    %62 = vector.shape_cast %61 : vector<1x1x10x256xf32> to vector<10x256xf32>
    %63 = vector.shape_cast %60 : vector<10x256xf32> to vector<1x1x10x256xf32>
    tpu.vector_store %arg8[%c0_30, %c1, %c0_31, %c0_32], %63 {strides = array<i32>} : memref<1x2x10x256xf32, #tpu.memory_space<vmem>>, vector<1x1x10x256xf32>,
    return
  }
  func.func @transform_0(%arg0: i32, %arg1: i32) -> (i32, i32, i32) {
    %c0_i32 = arith.constant 0 : i32
    %c0_i32_0 = arith.constant 0 : i32
    return %arg0, %c0_i32, %arg1 : i32, i32, i32
  }
  func.func @transform_1(%arg0: i32, %arg1: i32) -> (i32, i32, i32) {
    %c0_i32 = arith.constant 0 : i32
    %c0_i32_0 = arith.constant 0 : i32
    return %arg0, %c0_i32, %arg1 : i32, i32, i32
  }
  func.func @transform_2(%arg0: i32, %arg1: i32) -> (i32, i32, i32) {
    %c0_i32 = arith.constant 0 : i32
    %c0_i32_0 = arith.constant 0 : i32
    return %arg0, %c0_i32, %arg1 : i32, i32, i32
  }
  func.func @transform_3(%arg0: i32, %arg1: i32) -> (i32, i32, i32) {
    %c0_i32 = arith.constant 0 : i32
    %c0_i32_0 = arith.constant 0 : i32
    return %arg0, %c0_i32, %arg1 : i32, i32, i32
  }
  func.func @transform_4(%arg0: i32, %arg1: i32) -> (i32, i32) {
    %c0_i32 = arith.constant 0 : i32
    %c0_i32_0 = arith.constant 0 : i32
    %c0_i32_1 = arith.constant 0 : i32
    return %c0_i32, %c0_i32_0 : i32, i32
  }
  func.func @transform_5(%arg0: i32, %arg1: i32) -> (i32, i32, i32) {
    %c0_i32 = arith.constant 0 : i32
    %c0_i32_0 = arith.constant 0 : i32
    return %arg0, %c0_i32, %arg1 : i32, i32, i32
  }
  func.func @transform_6(%arg0: i32, %arg1: i32) -> (i32, i32, i32, i32) {
    %c0_i32 = arith.constant 0 : i32
    %c0_i32_0 = arith.constant 0 : i32
    %c0_i32_1 = arith.constant 0 : i32
    return %arg0, %c0_i32, %c0_i32_0, %arg1 : i32, i32, i32, i32
  }
}

</mosaic_0001>

<llo_original>
// kernel: tpu_custom_call.1
$region0: #{tpu_custom_call.1}
  #allocation0 [shape = 'u32[]', space=smem, size = 0x4, offset = 0x4, fixed_abs, tag = 'smem constant byte address 0x4 - core index']
  #allocation1 [shape = 'u32[144,128]{1,0:T(1,128)}', space=vmem, size = 0x12000, scoped, tag = 'internal scratch']
  %s0 = inlined_call_operand.vmem [shape: f32[2,10,256], index: 0, kind: input, shape index: {}]
  %s1 = inlined_call_operand.vmem [shape: f32[2,1,256], index: 1, kind: input, shape index: {}]
  %s2 = inlined_call_operand.vmem [shape: f32[2,10,256], index: 2, kind: input, shape index: {}]
  %s3 = inlined_call_operand.vmem [shape: f32[2,10,256], index: 3, kind: input, shape index: {}]
  %s4 = inlined_call_operand.vmem [shape: f32[12,31], index: 4, kind: input, shape index: {}]
  %s5 = inlined_call_operand.hbm [shape: f32[2,2,256], index: 5, kind: output, shape index: {0}]
  %s6 = inlined_call_operand.vmem [shape: f32[2,2,10,256], index: 6, kind: output, shape index: {1}]
  %7 = xla_tuple %s5, %s6
  %s8 = sld [smem:[#allocation0]]
  $region61: #{tpu_custom_call.1} parent=0
    _
  %s10 = ssub.s32 1, %s8
  %s11 = scalar_select 0, %s10, %s8
  $region1: #{tpu_custom_call.1} parent=0
    #allocation2 [shape = 'u8[4096]{0}', space=vmem, size = 0x1000, scoped, tag = 'output window, operand 0']
    #allocation3 [shape = 's32[2]{0}', space=sflag, size = 0x8, scoped, tag = 'scoped memory for tpu_custom_call.1']
    %12 = vsyncpa [#allocation3], 0
    %s13 = scalar_lea.sflag [#allocation3], 1
    %14 = vsyncpa %s13, 0
    loop: start=0, step=1, limit=4
    $region2: #{tpu_custom_call.1} parent=1 // loop_pre_header
      _
    $region3: #{tpu_custom_call.1} parent=1 // loop_header
      %s16 = sphi 0, %s20
      %p17 = scmp.ge.s32.totalorder %s16, 4
      %s23 = sphi 0, %s35
      %s24 = sphi 0, %s31
      %s25 = sphi 0, %s23
      %s26 = sphi 0, %s24
      %s27 = sphi 0, %s25
      %s28 = sphi 0, %s26
      %s40 = sphi 0, %s42
      %s43 = sphi 0, %s40
      %s44 = sphi 0, %s43
      %s60 = sphi 0, %s44
      %s68 = sphi 0, %s70
      %s71 = sphi 0, %s68
      %s72 = sphi 0, %s71
      %s88 = sphi 0, %s72
      %s96 = sphi 0, %s98
      %s99 = sphi 0, %s96
      %s100 = sphi 0, %s99
      %s116 = sphi 0, %s100
      %s124 = sphi 0, %s126
      %s127 = sphi 0, %s124
      %s128 = sphi 0, %s127
      %s144 = sphi 0, %s128
      %s148 = sphi 0, %s148
      %s150 = sphi 0, %s148
      %s151 = sphi 0, %s150
      %s165 = sphi 0, %s151
      %s173 = sphi 0, %s175
      %s176 = sphi 0, %s173
      %s177 = sphi 0, %s176
      %s193 = sphi 0, %s177
      %s201 = sphi 0, %s203
      %s204 = sphi 0, %s201
      %s205 = sphi 0, %s204
      %s221 = sphi 0, %s205
    $region4: #{tpu_custom_call.1} parent=1 // loop_header_branch
      %19 = sbr.rel (%p17) target = $region8
    $region5: #{tpu_custom_call.1} parent=1 // loop_body
      %s21 = ssub.s32 %s16, 1
      %s22 = ssub.s32 %s16, 2
      %s29 = sadd.s32 1, %s24
      %p30 = scmp.ge.s32.totalorder %s29, 1
      %s31 = scalar_select %p30, 0, %s29
      %s32 = sadd.s32 1, %s23
      %s33 = scalar_select %p30, %s32, %s23
      %p34 = scmp.ge.s32.totalorder %s33, 2
      %s35 = scalar_select %p34, 0, %s33
      %s36 = ssub.s32 %s23, %s35
      %s37 = ssub.s32 %s24, %s31
      %s38 = sor.u32 %s36, %s37
      %p39 = scmp.eq.s32.totalorder %s38, 0
      %s41 = sadd.s32 %s40, 1
      %s42 = scalar_select %p39, %s40, %s41
      %p45 = pneg %p39
      %p46 = scmp.eq.s32.totalorder %s16, 1
      %p47 = por %p45, %p46
      %p48 = scmp.ne.s32.totalorder %s40, %s43
      %p49 = scmp.eq.s32.totalorder %s16, 0
      %p50 = por %p48, %p49
      %p51 = scmp.ne.s32.totalorder %s40, %s43
      %p52 = scmp.eq.s32.totalorder %s21, 1
      %p53 = por %p51, %p52
      %p54 = scmp.ne.s32.totalorder %s43, %s44
      %p55 = scmp.eq.s32.totalorder %s21, 0
      %p56 = por %p54, %p55
      %p57 = scmp.ne.s32.totalorder %s43, %s44
      %p58 = scmp.eq.s32.totalorder %s22, 1
      %p59 = por %p57, %p58
      %p61 = scmp.ne.s32.totalorder %s44, %s60
      %p62 = scmp.eq.s32.totalorder %s22, 0
      %p63 = por %p61, %p62
      %s64 = ssub.s32 %s23, %s35
      %s65 = ssub.s32 %s24, %s31
      %s66 = sor.u32 %s64, %s65
      %p67 = scmp.eq.s32.totalorder %s66, 0
      %s69 = sadd.s32 %s68, 1
      %s70 = scalar_select %p67, %s68, %s69
      %p73 = pneg %p67
      %p74 = scmp.eq.s32.totalorder %s16, 1
      %p75 = por %p73, %p74
      %p76 = scmp.ne.s32.totalorder %s68, %s71
      %p77 = scmp.eq.s32.totalorder %s16, 0
      %p78 = por %p76, %p77
      %p79 = scmp.ne.s32.totalorder %s68, %s71
      %p80 = scmp.eq.s32.totalorder %s21, 1
      %p81 = por %p79, %p80
      %p82 = scmp.ne.s32.totalorder %s71, %s72
      %p83 = scmp.eq.s32.totalorder %s21, 0
      %p84 = por %p82, %p83
      %p85 = scmp.ne.s32.totalorder %s71, %s72
      %p86 = scmp.eq.s32.totalorder %s22, 1
      %p87 = por %p85, %p86
      %p89 = scmp.ne.s32.totalorder %s72, %s88
      %p90 = scmp.eq.s32.totalorder %s22, 0
      %p91 = por %p89, %p90
      %s92 = ssub.s32 %s23, %s35
      %s93 = ssub.s32 %s24, %s31
      %s94 = sor.u32 %s92, %s93
      %p95 = scmp.eq.s32.totalorder %s94, 0
      %s97 = sadd.s32 %s96, 1
      %s98 = scalar_select %p95, %s96, %s97
      %p101 = pneg %p95
      %p102 = scmp.eq.s32.totalorder %s16, 1
      %p103 = por %p101, %p102
      %p104 = scmp.ne.s32.totalorder %s96, %s99
      %p105 = scmp.eq.s32.totalorder %s16, 0
      %p106 = por %p104, %p105
      %p107 = scmp.ne.s32.totalorder %s96, %s99
      %p108 = scmp.eq.s32.totalorder %s21, 1
      %p109 = por %p107, %p108
      %p110 = scmp.ne.s32.totalorder %s99, %s100
      %p111 = scmp.eq.s32.totalorder %s21, 0
      %p112 = por %p110, %p111
      %p113 = scmp.ne.s32.totalorder %s99, %s100
      %p114 = scmp.eq.s32.totalorder %s22, 1
      %p115 = por %p113, %p114
      %p117 = scmp.ne.s32.totalorder %s100, %s116
      %p118 = scmp.eq.s32.totalorder %s22, 0
      %p119 = por %p117, %p118
      %s120 = ssub.s32 %s23, %s35
      %s121 = ssub.s32 %s24, %s31
      %s122 = sor.u32 %s120, %s121
      %p123 = scmp.eq.s32.totalorder %s122, 0
      %s125 = sadd.s32 %s124, 1
      %s126 = scalar_select %p123, %s124, %s125
      %p129 = pneg %p123
      %p130 = scmp.eq.s32.totalorder %s16, 1
      %p131 = por %p129, %p130
      %p132 = scmp.ne.s32.totalorder %s124, %s127
      %p133 = scmp.eq.s32.totalorder %s16, 0
      %p134 = por %p132, %p133
      %p135 = scmp.ne.s32.totalorder %s124, %s127
      %p136 = scmp.eq.s32.totalorder %s21, 1
      %p137 = por %p135, %p136
      %p138 = scmp.ne.s32.totalorder %s127, %s128
      %p139 = scmp.eq.s32.totalorder %s21, 0
      %p140 = por %p138, %p139
      %p141 = scmp.ne.s32.totalorder %s127, %s128
      %p142 = scmp.eq.s32.totalorder %s22, 1
      %p143 = por %p141, %p142
      %p145 = scmp.ne.s32.totalorder %s128, %s144
      %p146 = scmp.eq.s32.totalorder %s22, 0
      %p147 = por %p145, %p146
      %s149 = sadd.s32 %s148, 1
      %p152 = scmp.eq.s32.totalorder %s16, 1
      %p153 = scmp.ne.s32.totalorder %s148, %s150
      %p154 = scmp.eq.s32.totalorder %s16, 0
      %p155 = por %p153, %p154
      %p156 = scmp.ne.s32.totalorder %s148, %s150
      %p157 = scmp.eq.s32.totalorder %s21, 1
      %p158 = por %p156, %p157
      %p159 = scmp.ne.s32.totalorder %s150, %s151
      %p160 = scmp.eq.s32.totalorder %s21, 0
      %p161 = por %p159, %p160
      %p162 = scmp.ne.s32.totalorder %s150, %s151
      %p163 = scmp.eq.s32.totalorder %s22, 1
      %p164 = por %p162, %p163
      %p166 = scmp.ne.s32.totalorder %s151, %s165
      %p167 = scmp.eq.s32.totalorder %s22, 0
      %p168 = por %p166, %p167
      %s169 = ssub.s32 %s23, %s35
      %s170 = ssub.s32 %s24, %s31
      %s171 = sor.u32 %s169, %s170
      %p172 = scmp.eq.s32.totalorder %s171, 0
      %s174 = sadd.s32 %s173, 1
      %s175 = scalar_select %p172, %s173, %s174
      %p178 = pneg %p172
      %p179 = scmp.eq.s32.totalorder %s16, 1
      %p180 = por %p178, %p179
      %p181 = scmp.ne.s32.totalorder %s173, %s176
      %p182 = scmp.eq.s32.totalorder %s16, 0
      %p183 = por %p181, %p182
      %p184 = scmp.ne.s32.totalorder %s173, %s176
      %p185 = scmp.eq.s32.totalorder %s21, 1
      %p186 = por %p184, %p185
      %p187 = scmp.ne.s32.totalorder %s176, %s177
      %p188 = scmp.eq.s32.totalorder %s21, 0
      %p189 = por %p187, %p188
      %p190 = scmp.ne.s32.totalorder %s176, %s177
      %p191 = scmp.eq.s32.totalorder %s22, 1
      %p192 = por %p190, %p191
      %p194 = scmp.ne.s32.totalorder %s177, %s193
      %p195 = scmp.eq.s32.totalorder %s22, 0
      %p196 = por %p194, %p195
      %s197 = ssub.s32 %s23, %s35
      %s198 = ssub.s32 %s24, %s31
      %s199 = sor.u32 %s197, %s198
      %p200 = scmp.eq.s32.totalorder %s199, 0
      %s202 = sadd.s32 %s201, 1
      %s203 = scalar_select %p200, %s201, %s202
      %p206 = pneg %p200
      %p207 = scmp.eq.s32.totalorder %s16, 1
      %p208 = por %p206, %p207
      %p209 = scmp.ne.s32.totalorder %s201, %s204
      %p210 = scmp.eq.s32.totalorder %s16, 0
      %p211 = por %p209, %p210
      %p212 = scmp.ne.s32.totalorder %s201, %s204
      %p213 = scmp.eq.s32.totalorder %s21, 1
      %p214 = por %p212, %p213
      %p215 = scmp.ne.s32.totalorder %s204, %s205
      %p216 = scmp.eq.s32.totalorder %s21, 0
      %p217 = por %p215, %p216
      %p218 = scmp.ne.s32.totalorder %s204, %s205
      %p219 = scmp.eq.s32.totalorder %s22, 1
      %p220 = por %p218, %p219
      %p222 = scmp.ne.s32.totalorder %s205, %s221
      %p223 = scmp.eq.s32.totalorder %s22, 0
      %p224 = por %p222, %p223
      %p225 = scmp.le.s32.totalorder 1, %s16
      %p226 = scmp.lt.s32.totalorder %s16, 3
      %p227 = pnand %p225, %p226
      %p228 = pneg %p227
      // Predicated region
      $region9: #{tpu_custom_call.1} parent=5 // pred_check
        _
      $region10: #{tpu_custom_call.1} parent=5 // pred_check_branch
        %230 = sbr.rel (%p227) target = $region12
      $region11: #{tpu_custom_call.1} parent=5 // pred_region
        %s231 = ssub.s32 %s16, 1
        // Predicated region
        $region13: #{tpu_custom_call.1} parent=11 // pred_check
          %p232 = pneg %p161
        $region14: #{tpu_custom_call.1} parent=11 // pred_check_branch
          %234 = sbr.rel (%p232) target = $region16
        $region15: #{tpu_custom_call.1} parent=11 // pred_region
          _
        $region16: #{tpu_custom_call.1} parent=11 // pred_fallthru
          _
      $region12: #{tpu_custom_call.1} parent=5 // pred_fallthru
        _
      %p235 = scmp.lt.s32.totalorder %s16, 2
      // Predicated region
      $region17: #{tpu_custom_call.1} parent=5 // pred_check
        %p236 = pneg %p235
      $region18: #{tpu_custom_call.1} parent=5 // pred_check_branch
        %238 = sbr.rel (%p236) target = $region20
      $region19: #{tpu_custom_call.1} parent=5 // pred_region
        // Predicated region
        $region21: #{tpu_custom_call.1} parent=19 // pred_check
          %p239 = pneg %p50
        $region22: #{tpu_custom_call.1} parent=19 // pred_check_branch
          %241 = sbr.rel (%p239) target = $region24
        $region23: #{tpu_custom_call.1} parent=19 // pred_region
          %s242 = smul.u32 2, %s24
          %p243 = scmp.lt.s32.totalorder %s23, 1
          %s244 = scalar_select %p243, %s23, 1
          %p245 = scmp.lt.s32.totalorder %s242, 1
          %s246 = scalar_select %p245, %s242, 1
          %s247 = smul.addr %s244, 4
          %s248 = sadd.s32 %s246, %s247
          %s249 = smul.addr %s248, 8
          %s250 = scalar_lea.vmem %s0, %s249
          %s251 = smul.u32 2, %s24
        $region24: #{tpu_custom_call.1} parent=19 // pred_fallthru
          _
        // Predicated region
        $region25: #{tpu_custom_call.1} parent=19 // pred_check
          %p252 = pneg %p78
        $region26: #{tpu_custom_call.1} parent=19 // pred_check_branch
          %254 = sbr.rel (%p252) target = $region28
        $region27: #{tpu_custom_call.1} parent=19 // pred_region
          %s255 = smul.u32 2, %s24
          %p256 = scmp.lt.s32.totalorder %s23, 1
          %s257 = scalar_select %p256, %s23, 1
          %p258 = scmp.lt.s32.totalorder %s255, 1
          %s259 = scalar_select %p258, %s255, 1
          %s260 = smul.addr %s257, 2
          %s261 = sadd.s32 %s259, %s260
          %s262 = scalar_lea.vmem %s1, %s261
          %s263 = smul.u32 2, %s24
        $region28: #{tpu_custom_call.1} parent=19 // pred_fallthru
          _
        // Predicated region
        $region29: #{tpu_custom_call.1} parent=19 // pred_check
          %p264 = pneg %p106
        $region30: #{tpu_custom_call.1} parent=19 // pred_check_branch
          %266 = sbr.rel (%p264) target = $region32
        $region31: #{tpu_custom_call.1} parent=19 // pred_region
          %s267 = smul.u32 2, %s24
          %p268 = scmp.lt.s32.totalorder %s23, 1
          %s269 = scalar_select %p268, %s23, 1
          %p270 = scmp.lt.s32.totalorder %s267, 1
          %s271 = scalar_select %p270, %s267, 1
          %s272 = smul.addr %s269, 4
          %s273 = sadd.s32 %s271, %s272
          %s274 = smul.addr %s273, 8
          %s275 = scalar_lea.vmem %s2, %s274
          %s276 = smul.u32 2, %s24
        $region32: #{tpu_custom_call.1} parent=19 // pred_fallthru
          _
        // Predicated region
        $region33: #{tpu_custom_call.1} parent=19 // pred_check
          %p277 = pneg %p134
        $region34: #{tpu_custom_call.1} parent=19 // pred_check_branch
          %279 = sbr.rel (%p277) target = $region36
        $region35: #{tpu_custom_call.1} parent=19 // pred_region
          %s280 = smul.u32 2, %s24
          %p281 = scmp.lt.s32.totalorder %s23, 1
          %s282 = scalar_select %p281, %s23, 1
          %p283 = scmp.lt.s32.totalorder %s280, 1
          %s284 = scalar_select %p283, %s280, 1
          %s285 = smul.addr %s282, 4
          %s286 = sadd.s32 %s284, %s285
          %s287 = smul.addr %s286, 8
          %s288 = scalar_lea.vmem %s3, %s287
          %s289 = smul.u32 2, %s24
        $region36: #{tpu_custom_call.1} parent=19 // pred_fallthru
          _
      $region20: #{tpu_custom_call.1} parent=5 // pred_fallthru
        _
      %p290 = scmp.le.s32.totalorder 1, %s16
      %p291 = scmp.lt.s32.totalorder %s16, 3
      %p292 = pnand %p290, %p291
      %p293 = pneg %p292
      // Predicated region
      $region37: #{tpu_custom_call.1} parent=5 // pred_check
        _
      $region38: #{tpu_custom_call.1} parent=5 // pred_check_branch
        %295 = sbr.rel (%p292) target = $region40
      $region39: #{tpu_custom_call.1} parent=5 // pred_region
        %s296 = ssub.s32 %s16, 1
        %s297 = smul.u32 2, %s26
        %p298 = scmp.lt.s32.totalorder %s25, 1
        %s299 = scalar_select %p298, %s25, 1
        %p300 = scmp.lt.s32.totalorder %s297, 1
        %s301 = scalar_select %p300, %s297, 1
        %s302 = smul.addr %s299, 4
        %s303 = sadd.s32 %s301, %s302
        %s304 = smul.addr %s303, 8
        %s305 = scalar_lea.vmem %s0, %s304
        %p306 = pneg %p56
        %p307 = pneg %p53
        %s308 = smul.u32 2, %s26
        %p309 = scmp.lt.s32.totalorder %s25, 1
        %s310 = scalar_select %p309, %s25, 1
        %p311 = scmp.lt.s32.totalorder %s308, 1
        %s312 = scalar_select %p311, %s308, 1
        %s313 = smul.addr %s310, 2
        %s314 = sadd.s32 %s312, %s313
        %s315 = scalar_lea.vmem %s1, %s314
        %p316 = pneg %p84
        %p317 = pneg %p81
        %s318 = smul.u32 2, %s26
        %p319 = scmp.lt.s32.totalorder %s25, 1
        %s320 = scalar_select %p319, %s25, 1
        %p321 = scmp.lt.s32.totalorder %s318, 1
        %s322 = scalar_select %p321, %s318, 1
        %s323 = smul.addr %s320, 4
        %s324 = sadd.s32 %s322, %s323
        %s325 = smul.addr %s324, 8
        %s326 = scalar_lea.vmem %s2, %s325
        %p327 = pneg %p112
        %p328 = pneg %p109
        %s329 = smul.u32 2, %s26
        %p330 = scmp.lt.s32.totalorder %s25, 1
        %s331 = scalar_select %p330, %s25, 1
        %p332 = scmp.lt.s32.totalorder %s329, 1
        %s333 = scalar_select %p332, %s329, 1
        %s334 = smul.addr %s331, 4
        %s335 = sadd.s32 %s333, %s334
        %s336 = smul.addr %s335, 8
        %s337 = scalar_lea.vmem %s3, %s336
        %p338 = pneg %p140
        %p339 = pneg %p137
        %p340 = pneg %p161
        %p341 = pneg %p158
        %p342 = pneg %p189
        %p343 = pneg %p186
        %s344 = sand.u32 %s176, 1
        %s345 = scalar_lea.sflag [#allocation3], %s344
        %s346 = sand.u32 %s176, 1
        %s347 = smul.addr %s346, 4
        %s348 = scalar_lea.vmem [#allocation2], %s347
        %p349 = pneg %p217
        %p350 = pneg %p214
        %s351 = smul.u32 2, %s26
        %p352 = scmp.lt.s32.totalorder %s25, 1
        %s353 = scalar_select %p352, %s25, 1
        %p354 = scmp.lt.s32.totalorder %s351, 1
        %s355 = scalar_select %p354, %s351, 1
        %s356 = smul.addr %s353, 8
        %s357 = sadd.s32 %s355, %s356
        %s358 = smul.addr %s357, 8
        %s359 = scalar_lea.vmem %s6, %s358
        %s360 = smul.u32 2, %s26
        %p361 = scmp.lt.s32.totalorder %s25, 1
        %s362 = scalar_select %p361, %s25, 1
        %p363 = scmp.lt.s32.totalorder %s360, 1
        %s364 = scalar_select %p363, %s360, 1
        %s365 = smul.addr %s362, 4
        %s366 = sadd.s32 %s364, %s365
        %s367 = smul.addr %s366, 8
        %s368 = scalar_lea.vmem %s0, %s367
        %s369 = smul.u32 2, %s26
        %s370 = smul.u32 2, %s26
        %p371 = scmp.lt.s32.totalorder %s25, 1
        %s372 = scalar_select %p371, %s25, 1
        %p373 = scmp.lt.s32.totalorder %s370, 1
        %s374 = scalar_select %p373, %s370, 1
        %s375 = smul.addr %s372, 2
        %s376 = sadd.s32 %s374, %s375
        %s377 = scalar_lea.vmem %s1, %s376
        %s378 = smul.u32 2, %s26
        %s379 = smul.u32 2, %s26
        %p380 = scmp.lt.s32.totalorder %s25, 1
        %s381 = scalar_select %p380, %s25, 1
        %p382 = scmp.lt.s32.totalorder %s379, 1
        %s383 = scalar_select %p382, %s379, 1
        %s384 = smul.addr %s381, 4
        %s385 = sadd.s32 %s383, %s384
        %s386 = smul.addr %s385, 8
        %s387 = scalar_lea.vmem %s2, %s386
        %s388 = smul.u32 2, %s26
        %s389 = smul.u32 2, %s26
        %p390 = scmp.lt.s32.totalorder %s25, 1
        %s391 = scalar_select %p390, %s25, 1
        %p392 = scmp.lt.s32.totalorder %s389, 1
        %s393 = scalar_select %p392, %s389, 1
        %s394 = smul.addr %s391, 4
        %s395 = sadd.s32 %s393, %s394
        %s396 = smul.addr %s395, 8
        %s397 = scalar_lea.vmem %s3, %s396
        %s398 = smul.u32 2, %s26
        %s399 = smul.u32 2, %s26
        %s400 = smul.u32 2, %s26
        %p401 = scmp.lt.s32.totalorder %s25, 1
        %s402 = scalar_select %p401, %s25, 1
        %p403 = scmp.lt.s32.totalorder %s400, 1
        %s404 = scalar_select %p403, %s400, 1
        %s405 = smul.addr %s402, 8
        %s406 = sadd.s32 %s404, %s405
        %s407 = smul.addr %s406, 8
        %s408 = scalar_lea.vmem %s6, %s407
        %s409 = smul.u32 2, %s26
        %v410 = vld [vmem:[%s4] sm:$0xff]
        %v411 = vld [vmem:[%s4 + $0x8] sm:$0xf]
        %v412 = vld [vmem:[%s368] sm:$0xff]
        %v413 = vld [vmem:[%s368 + $0x8] sm:$0xff]
        %v414 = vld [vmem:[%s368 + $0x10] sm:$0x3]
        %v415 = vld [vmem:[%s368 + $0x18] sm:$0x3]
        %v416 = vld [vmem:[%s377] sm:$0x3]
        %v417 = vld [vmem:[%s387] sm:$0xff]
        %v418 = vld [vmem:[%s387 + $0x8] sm:$0xff]
        %v419 = vld [vmem:[%s387 + $0x10] sm:$0x3]
        %v420 = vld [vmem:[%s387 + $0x18] sm:$0x3]
        %v421 = vld [vmem:[%s397] sm:$0xff]
        %v422 = vld [vmem:[%s397 + $0x8] sm:$0xff]
        %v423 = vld [vmem:[%s397 + $0x10] sm:$0x3]
        %v424 = vld [vmem:[%s397 + $0x18] sm:$0x3]
        %426 = vrot.lane.b32.xlu0 %v410, 118
        %v427 = vpop.permute.xlu0 %426
        %vm428 = vcmask 80896
        %v429 = vsel %vm428, %v427, 0
        %vm431 = vcmask 1041408
        %v433 = vsel %vm431, %v419, 0
        %v436 = vsel %vm431, %v420, 0
        %438 = vmatprep.subr.mxu0 0.0
        %439 = vmatpush1.msra.mxu0 0.0
        %440 = vmatprep.subr.mxu0 0.0
        %441 = vmatpush1.msra.mxu0 0.0
        %442 = vmatprep.subr.mxu0 0.0
        %443 = vmatpush1.msra.mxu0 0.0
        %444 = vmatprep.subr.mxu0 0.0
        %445 = vmatpush1.msra.mxu0 0.0
        %446 = vmatprep.subr.mxu0 0.0
        %447 = vmatpush1.msra.mxu0 0.0
        %448 = vmatprep.subr.mxu0 0.0
        %449 = vmatpush1.msra.mxu0 0.0
        %450 = vmatprep.subr.mxu0 0.0
        %451 = vmatpush1.msra.mxu0 0.0
        %452 = vmatprep.subr.mxu0 0.0
        %453 = vmatpush1.msra.mxu0 0.0
        %454 = vmatprep.subr.mxu0 0.0
        %455 = vmatpush1.msra.mxu0 0.0
        %456 = vmatprep.subr.mxu0 0.0
        %457 = vmatpush1.msra.mxu0 0.0
        %458 = vmatprep.subr.mxu0 0.0
        %459 = vmatpush1.msra.mxu0 0.0
        %460 = vmatprep.subr.mxu0 0.0
        %461 = vmatpush1.msra.mxu0 0.0
        %462 = vmatprep.subr.mxu0 0.0
        %463 = vmatpush1.msra.mxu0 0.0
        %464 = vmatprep.subr.mxu0 0.0
        %465 = vmatpush1.msra.mxu0 0.0
        %466 = vmatprep.subr.mxu0 %v436
        %467 = vmatpush1.msra.mxu0 %v433
        %468 = vmatprep.subr.mxu0 %v418
        %469 = vmatpush1.msra.mxu0 %v417
        %470 = vmatprep.subr.mxu0 0.0
        %471 = vmatpush2.msra.mxu0 0.0
        %472 = vmatprep.subr.mxu0 0.0
        %473 = vmatpush2.msra.mxu0 0.0
        %474 = vmatprep.subr.mxu0 0.0
        %475 = vmatpush2.msra.mxu0 0.0
        %476 = vmatprep.subr.mxu0 0.0
        %477 = vmatpush2.msra.mxu0 0.0
        %478 = vmatprep.subr.mxu0 0.0
        %479 = vmatpush2.msra.mxu0 0.0
        %480 = vmatprep.subr.mxu0 0.0
        %481 = vmatpush2.msra.mxu0 0.0
        %482 = vmatprep.subr.mxu0 0.0
        %483 = vmatpush2.msra.mxu0 0.0
        %484 = vmatprep.subr.mxu0 0.0
        %485 = vmatpush2.msra.mxu0 0.0
        %486 = vmatprep.subr.mxu0 0.0
        %487 = vmatpush2.msra.mxu0 0.0
        %488 = vmatprep.subr.mxu0 0.0
        %489 = vmatpush2.msra.mxu0 0.0
        %490 = vmatprep.subr.mxu0 0.0
        %491 = vmatpush2.msra.mxu0 0.0
        %492 = vmatprep.subr.mxu0 0.0
        %493 = vmatpush2.msra.mxu0 0.0
        %494 = vmatprep.subr.mxu0 0.0
        %495 = vmatpush2.msra.mxu0 0.0
        %496 = vmatprep.subr.mxu0 0.0
        %497 = vmatpush2.msra.mxu0 0.0
        %498 = vmatprep.subr.mxu0 0.0
        %499 = vmatpush2.msra.mxu0 0.0
        %500 = vmatprep.subr.mxu0 0.0
        %501 = vmatpush2.msra.mxu0 0.0
        %502 = vmatprep.mubr.f32.mxu0 0.0
        %503 = vmatmul.mubr.f32.gmra.mxu0 %v429
        %v504 = vpop.f32.mrf.mxu0
        %v505 = vadd.f32 0.0, %v504
        %v506 = vpop.f32.mrf.mxu0
        %v507 = vadd.f32 0.0, %v506
        %508 = vdwg.mxu0
        %v509 = vsel %vm428, %v410, 0
        %v512 = vsel %vm431, %v414, 0
        %v515 = vsel %vm431, %v415, 0
        %517 = vmatprep.subr.mxu0 0.0
        %518 = vmatpush1.msra.mxu0 0.0
        %519 = vmatprep.subr.mxu0 0.0
        %520 = vmatpush1.msra.mxu0 0.0
        %521 = vmatprep.subr.mxu0 0.0
        %522 = vmatpush1.msra.mxu0 0.0
        %523 = vmatprep.subr.mxu0 0.0
        %524 = vmatpush1.msra.mxu0 0.0
        %525 = vmatprep.subr.mxu0 0.0
        %526 = vmatpush1.msra.mxu0 0.0
        %527 = vmatprep.subr.mxu0 0.0
        %528 = vmatpush1.msra.mxu0 0.0
        %529 = vmatprep.subr.mxu0 0.0
        %530 = vmatpush1.msra.mxu0 0.0
        %531 = vmatprep.subr.mxu0 0.0
        %532 = vmatpush1.msra.mxu0 0.0
        %533 = vmatprep.subr.mxu0 0.0
        %534 = vmatpush1.msra.mxu0 0.0
        %535 = vmatprep.subr.mxu0 0.0
        %536 = vmatpush1.msra.mxu0 0.0
        %537 = vmatprep.subr.mxu0 0.0
        %538 = vmatpush1.msra.mxu0 0.0
        %539 = vmatprep.subr.mxu0 0.0
        %540 = vmatpush1.msra.mxu0 0.0
        %541 = vmatprep.subr.mxu0 0.0
        %542 = vmatpush1.msra.mxu0 0.0
        %543 = vmatprep.subr.mxu0 0.0
        %544 = vmatpush1.msra.mxu0 0.0
        %545 = vmatprep.subr.mxu0 %v515
        %546 = vmatpush1.msra.mxu0 %v512
        %547 = vmatprep.subr.mxu0 %v413
        %548 = vmatpush1.msra.mxu0 %v412
        %549 = vmatprep.subr.mxu0 0.0
        %550 = vmatpush2.msra.mxu0 0.0
        %551 = vmatprep.subr.mxu0 0.0
        %552 = vmatpush2.msra.mxu0 0.0
        %553 = vmatprep.subr.mxu0 0.0
        %554 = vmatpush2.msra.mxu0 0.0
        %555 = vmatprep.subr.mxu0 0.0
        %556 = vmatpush2.msra.mxu0 0.0
        %557 = vmatprep.subr.mxu0 0.0
        %558 = vmatpush2.msra.mxu0 0.0
        %559 = vmatprep.subr.mxu0 0.0
        %560 = vmatpush2.msra.mxu0 0.0
        %561 = vmatprep.subr.mxu0 0.0
        %562 = vmatpush2.msra.mxu0 0.0
        %563 = vmatprep.subr.mxu0 0.0
        %564 = vmatpush2.msra.mxu0 0.0
        %565 = vmatprep.subr.mxu0 0.0
        %566 = vmatpush2.msra.mxu0 0.0
        %567 = vmatprep.subr.mxu0 0.0
        %568 = vmatpush2.msra.mxu0 0.0
        %569 = vmatprep.subr.mxu0 0.0
        %570 = vmatpush2.msra.mxu0 0.0
        %571 = vmatprep.subr.mxu0 0.0
        %572 = vmatpush2.msra.mxu0 0.0
        %573 = vmatprep.subr.mxu0 0.0
        %574 = vmatpush2.msra.mxu0 0.0
        %575 = vmatprep.subr.mxu0 0.0
        %576 = vmatpush2.msra.mxu0 0.0
        %577 = vmatprep.subr.mxu0 0.0
        %578 = vmatpush2.msra.mxu0 0.0
        %579 = vmatprep.subr.mxu0 0.0
        %580 = vmatpush2.msra.mxu0 0.0
        %581 = vmatprep.mubr.f32.mxu0 0.0
        %582 = vmatmul.mubr.f32.gmra.mxu0 %v509
        %v583 = vpop.f32.mrf.mxu0
        %v584 = vadd.f32 %v505, %v583
        %v585 = vpop.f32.mrf.mxu0
        %v586 = vadd.f32 %v507, %v585
        %587 = vdwg.mxu0
        %588 = vrot.lane.b32.xlu0 %v410, 108
        %v589 = vpop.permute.xlu0 %588
        %v590 = vsel %vm428, %v589, 0
        %v593 = vsel %vm431, %v423, 0
        %v596 = vsel %vm431, %v424, 0
        %598 = vmatprep.subr.mxu0 0.0
        %599 = vmatpush1.msra.mxu0 0.0
        %600 = vmatprep.subr.mxu0 0.0
        %601 = vmatpush1.msra.mxu0 0.0
        %602 = vmatprep.subr.mxu0 0.0
        %603 = vmatpush1.msra.mxu0 0.0
        %604 = vmatprep.subr.mxu0 0.0
        %605 = vmatpush1.msra.mxu0 0.0
        %606 = vmatprep.subr.mxu0 0.0
        %607 = vmatpush1.msra.mxu0 0.0
        %608 = vmatprep.subr.mxu0 0.0
        %609 = vmatpush1.msra.mxu0 0.0
        %610 = vmatprep.subr.mxu0 0.0
        %611 = vmatpush1.msra.mxu0 0.0
        %612 = vmatprep.subr.mxu0 0.0
        %613 = vmatpush1.msra.mxu0 0.0
        %614 = vmatprep.subr.mxu0 0.0
        %615 = vmatpush1.msra.mxu0 0.0
        %616 = vmatprep.subr.mxu0 0.0
        %617 = vmatpush1.msra.mxu0 0.0
        %618 = vmatprep.subr.mxu0 0.0
        %619 = vmatpush1.msra.mxu0 0.0
        %620 = vmatprep.subr.mxu0 0.0
        %621 = vmatpush1.msra.mxu0 0.0
        %622 = vmatprep.subr.mxu0 0.0
        %623 = vmatpush1.msra.mxu0 0.0
        %624 = vmatprep.subr.mxu0 0.0
        %625 = vmatpush1.msra.mxu0 0.0
        %626 = vmatprep.subr.mxu0 %v596
        %627 = vmatpush1.msra.mxu0 %v593
        %628 = vmatprep.subr.mxu0 %v422
        %629 = vmatpush1.msra.mxu0 %v421
        %630 = vmatprep.subr.mxu0 0.0
        %631 = vmatpush2.msra.mxu0 0.0
        %632 = vmatprep.subr.mxu0 0.0
        %633 = vmatpush2.msra.mxu0 0.0
        %634 = vmatprep.subr.mxu0 0.0
        %635 = vmatpush2.msra.mxu0 0.0
        %636 = vmatprep.subr.mxu0 0.0
        %637 = vmatpush2.msra.mxu0 0.0
        %638 = vmatprep.subr.mxu0 0.0
        %639 = vmatpush2.msra.mxu0 0.0
        %640 = vmatprep.subr.mxu0 0.0
        %641 = vmatpush2.msra.mxu0 0.0
        %642 = vmatprep.subr.mxu0 0.0
        %643 = vmatpush2.msra.mxu0 0.0
        %644 = vmatprep.subr.mxu0 0.0
        %645 = vmatpush2.msra.mxu0 0.0
        %646 = vmatprep.subr.mxu0 0.0
        %647 = vmatpush2.msra.mxu0 0.0
        %648 = vmatprep.subr.mxu0 0.0
        %649 = vmatpush2.msra.mxu0 0.0
        %650 = vmatprep.subr.mxu0 0.0
        %651 = vmatpush2.msra.mxu0 0.0
        %652 = vmatprep.subr.mxu0 0.0
        %653 = vmatpush2.msra.mxu0 0.0
        %654 = vmatprep.subr.mxu0 0.0
        %655 = vmatpush2.msra.mxu0 0.0
        %656 = vmatprep.subr.mxu0 0.0
        %657 = vmatpush2.msra.mxu0 0.0
        %658 = vmatprep.subr.mxu0 0.0
        %659 = vmatpush2.msra.mxu0 0.0
        %660 = vmatprep.subr.mxu0 0.0
        %661 = vmatpush2.msra.mxu0 0.0
        %662 = vmatprep.mubr.f32.mxu0 0.0
        %663 = vmatmul.mubr.f32.gmra.mxu0 %v590
        %v664 = vpop.f32.mrf.mxu0
        %v665 = vadd.f32 0.0, %v664
        %v666 = vpop.f32.mrf.mxu0
        %v667 = vadd.f32 0.0, %v666
        %668 = vdwg.mxu0
        %v669 = vadd.f32 %v584, %v665
        %v670 = vadd.f32 %v586, %v667
        %671 = vset.pattern.permute.xlu0 30
        %672 = vperm.xlu0 %671, %v410
        %v673 = vpop.permute.xlu0 %672
        %v675 = vadd.f32 %v669, %v673
        %v676 = vadd.f32 %v670, %v673
        %v679 = vcombine.low %v675, %v676
        %v681 = vunpack.c.l.s4 1983009808
        %v682 = vunpack.c.0.s8 %v681
        %v683 = vlaneseq
        %v684 = vshrl.u32 %v683, 7
        %v685 = vsub.s32 %v682, %v684
        %v686 = vrot.slane %v679, %v685
        %688 = vst [vmem:[%s348] sm:$0xf] %v686
        %v689 = vsel %vm431, %v675, -inf
        %v690 = vrot.slane %v689, 4
        %v691 = vmax.f32 %v689, %v690
        %v692 = vrot.slane %v691, 2
        %v693 = vmax.f32 %v691, %v692
        %v694 = vrot.slane %v693, 1
        %v695 = vmax.f32 %v693, %v694
        %v696 = vsel %vm431, %v676, -inf
        %v697 = vrot.slane %v696, 4
        %v698 = vmax.f32 %v696, %v697
        %v699 = vrot.slane %v698, 2
        %v700 = vmax.f32 %v698, %v699
        %v701 = vrot.slane %v700, 1
        %v702 = vmax.f32 %v700, %v701
        %v703 = vsub.f32 %v675, %v695
        %v704 = vsub.f32 %v676, %v702
        %v705 = vmul.f32 %v703, 1.442695
        %v706 = vpow.pop %v705
        %v707 = vmul.f32 %v704, 1.442695
        %v708 = vpow.pop %v707
        %v709 = vsel %vm431, %v706, 0.0
        %v710 = vrot.slane %v709, 4
        %v711 = vadd.f32 %v709, %v710
        %v712 = vrot.slane %v711, 2
        %v713 = vadd.f32 %v711, %v712
        %v714 = vrot.slane %v713, 1
        %v715 = vadd.f32 %v713, %v714
        %v716 = vsel %vm431, %v708, 0.0
        %v717 = vrot.slane %v716, 4
        %v718 = vadd.f32 %v716, %v717
        %v719 = vrot.slane %v718, 2
        %v720 = vadd.f32 %v718, %v719
        %v721 = vrot.slane %v720, 1
        %v722 = vadd.f32 %v720, %v721
        %v723 = vrcp.pop %v715
        %v724 = vrcp.pop %v722
        %v725 = vmul.f32 %v706, %v723
        %v726 = vmul.f32 %v708, %v724
        %v729 = vcombine.low %v725, %v726
        %v731 = vunpack.c.l.s4 1966171168
        %v732 = vunpack.c.0.s8 %v731
        %v733 = vlaneseq
        %v734 = vshrl.u32 %v733, 7
        %v735 = vsub.s32 %v732, %v734
        %v736 = vrot.slane %v729, %v735
        %v738 = vunpack.c.l.s4 1966171168
        %v739 = vunpack.c.0.s8 %v738
        %v740 = vlaneseq
        %v741 = vshrl.u32 %v740, 7
        %v742 = vsub.s32 %v739, %v741
        %v743 = vrot.slane %v736, %v742
        %v745 = vmul.f32 %v416, %v743
        %v747 = vlaneseq
        %v748 = vshrl.u32 %v747, 7
        %v749 = vsub.s32 0, %v748
        %v750 = vrot.slane %v745, %v749
        %v751 = vlaneseq
        %v752 = vshrl.u32 %v751, 7
        %v753 = vsub.s32 1, %v752
        %v754 = vrot.slane %v745, %v753
        %v757 = vmul.f32 %v412, %v750
        %v758 = vmul.f32 %v413, %v754
        %v759 = vmul.f32 %v414, %v750
        %v760 = vmul.f32 %v415, %v754
        %vm762 = vcmask 1045504
        %v763 = vrot.slane %v410, 2
        %v764 = vrot.slane %v411, 2
        %v765 = vsel %vm762, %v763, %v764
        %766 = vrot.lane.b32.xlu0 %v765, 118
        %v767 = vpop.permute.xlu0 %766
        %768 = vrot.lane.b32.xlu0 %v764, 118
        %v769 = vpop.permute.xlu0 %768
        %v770 = vsel %vm428, %v767, 0
        %v772 = vsel %vm428, %v769, 0
        %v775 = vsel %vm431, %v759, 0
        %v778 = vsel %vm431, %v760, 0
        %780 = vmatprep.subr.mxu0 0.0
        %781 = vmatpush1.msra.mxu0 0.0
        %782 = vmatprep.subr.mxu0 0.0
        %783 = vmatpush1.msra.mxu0 0.0
        %784 = vmatprep.subr.mxu0 0.0
        %785 = vmatpush1.msra.mxu0 0.0
        %786 = vmatprep.subr.mxu0 0.0
        %787 = vmatpush1.msra.mxu0 0.0
        %788 = vmatprep.subr.mxu0 0.0
        %789 = vmatpush1.msra.mxu0 0.0
        %790 = vmatprep.subr.mxu0 0.0
        %791 = vmatpush1.msra.mxu0 0.0
        %792 = vmatprep.subr.mxu0 0.0
        %793 = vmatpush1.msra.mxu0 0.0
        %794 = vmatprep.subr.mxu0 0.0
        %795 = vmatpush1.msra.mxu0 0.0
        %796 = vmatprep.subr.mxu0 0.0
        %797 = vmatpush1.msra.mxu0 0.0
        %798 = vmatprep.subr.mxu0 0.0
        %799 = vmatpush1.msra.mxu0 0.0
        %800 = vmatprep.subr.mxu0 0.0
        %801 = vmatpush1.msra.mxu0 0.0
        %802 = vmatprep.subr.mxu0 0.0
        %803 = vmatpush1.msra.mxu0 0.0
        %804 = vmatprep.subr.mxu0 0.0
        %805 = vmatpush1.msra.mxu0 0.0
        %806 = vmatprep.subr.mxu0 0.0
        %807 = vmatpush1.msra.mxu0 0.0
        %808 = vmatprep.subr.mxu0 %v778
        %809 = vmatpush1.msra.mxu0 %v775
        %810 = vmatprep.subr.mxu0 %v758
        %811 = vmatpush1.msra.mxu0 %v757
        %812 = vmatprep.subr.mxu0 0.0
        %813 = vmatpush2.msra.mxu0 0.0
        %814 = vmatprep.subr.mxu0 0.0
        %815 = vmatpush2.msra.mxu0 0.0
        %816 = vmatprep.subr.mxu0 0.0
        %817 = vmatpush2.msra.mxu0 0.0
        %818 = vmatprep.subr.mxu0 0.0
        %819 = vmatpush2.msra.mxu0 0.0
        %820 = vmatprep.subr.mxu0 0.0
        %821 = vmatpush2.msra.mxu0 0.0
        %822 = vmatprep.subr.mxu0 0.0
        %823 = vmatpush2.msra.mxu0 0.0
        %824 = vmatprep.subr.mxu0 0.0
        %825 = vmatpush2.msra.mxu0 0.0
        %826 = vmatprep.subr.mxu0 0.0
        %827 = vmatpush2.msra.mxu0 0.0
        %828 = vmatprep.subr.mxu0 0.0
        %829 = vmatpush2.msra.mxu0 0.0
        %830 = vmatprep.subr.mxu0 0.0
        %831 = vmatpush2.msra.mxu0 0.0
        %832 = vmatprep.subr.mxu0 0.0
        %833 = vmatpush2.msra.mxu0 0.0
        %834 = vmatprep.subr.mxu0 0.0
        %835 = vmatpush2.msra.mxu0 0.0
        %836 = vmatprep.subr.mxu0 0.0
        %837 = vmatpush2.msra.mxu0 0.0
        %838 = vmatprep.subr.mxu0 0.0
        %839 = vmatpush2.msra.mxu0 0.0
        %840 = vmatprep.subr.mxu0 0.0
        %841 = vmatpush2.msra.mxu0 0.0
        %842 = vmatprep.subr.mxu0 0.0
        %843 = vmatpush2.msra.mxu0 0.0
        %844 = vmatprep.mubr.f32.mxu0 0.0
        %845 = vmatmul.mubr.f32.gmra.mxu0 %v770
        %v846 = vpop.f32.mrf.mxu0
        %v847 = vadd.f32 0.0, %v846
        %v848 = vpop.f32.mrf.mxu0
        %v849 = vadd.f32 0.0, %v848
        %850 = vmatprep.mubr.f32.mxu0 0.0
        %851 = vmatmul.mubr.f32.gmra.mxu0 %v772
        %v852 = vpop.f32.mrf.mxu0
        %v853 = vadd.f32 0.0, %v852
        %v854 = vpop.f32.mrf.mxu0
        %v855 = vadd.f32 0.0, %v854
        %856 = vdwg.mxu0
        %v857 = vsel %vm428, %v765, 0
        %v859 = vsel %vm428, %v764, 0
        %861 = vmatprep.subr.mxu0 0.0
        %862 = vmatpush1.msra.mxu0 0.0
        %863 = vmatprep.subr.mxu0 0.0
        %864 = vmatpush1.msra.mxu0 0.0
        %865 = vmatprep.subr.mxu0 0.0
        %866 = vmatpush1.msra.mxu0 0.0
        %867 = vmatprep.subr.mxu0 0.0
        %868 = vmatpush1.msra.mxu0 0.0
        %869 = vmatprep.subr.mxu0 0.0
        %870 = vmatpush1.msra.mxu0 0.0
        %871 = vmatprep.subr.mxu0 0.0
        %872 = vmatpush1.msra.mxu0 0.0
        %873 = vmatprep.subr.mxu0 0.0
        %874 = vmatpush1.msra.mxu0 0.0
        %875 = vmatprep.subr.mxu0 0.0
        %876 = vmatpush1.msra.mxu0 0.0
        %877 = vmatprep.subr.mxu0 0.0
        %878 = vmatpush1.msra.mxu0 0.0
        %879 = vmatprep.subr.mxu0 0.0
        %880 = vmatpush1.msra.mxu0 0.0
        %881 = vmatprep.subr.mxu0 0.0
        %882 = vmatpush1.msra.mxu0 0.0
        %883 = vmatprep.subr.mxu0 0.0
        %884 = vmatpush1.msra.mxu0 0.0
        %885 = vmatprep.subr.mxu0 0.0
        %886 = vmatpush1.msra.mxu0 0.0
        %887 = vmatprep.subr.mxu0 0.0
        %888 = vmatpush1.msra.mxu0 0.0
        %889 = vmatprep.subr.mxu0 %v436
        %890 = vmatpush1.msra.mxu0 %v433
        %891 = vmatprep.subr.mxu0 %v418
        %892 = vmatpush1.msra.mxu0 %v417
        %893 = vmatprep.subr.mxu0 0.0
        %894 = vmatpush2.msra.mxu0 0.0
        %895 = vmatprep.subr.mxu0 0.0
        %896 = vmatpush2.msra.mxu0 0.0
        %897 = vmatprep.subr.mxu0 0.0
        %898 = vmatpush2.msra.mxu0 0.0
        %899 = vmatprep.subr.mxu0 0.0
        %900 = vmatpush2.msra.mxu0 0.0
        %901 = vmatprep.subr.mxu0 0.0
        %902 = vmatpush2.msra.mxu0 0.0
        %903 = vmatprep.subr.mxu0 0.0
        %904 = vmatpush2.msra.mxu0 0.0
        %905 = vmatprep.subr.mxu0 0.0
        %906 = vmatpush2.msra.mxu0 0.0
        %907 = vmatprep.subr.mxu0 0.0
        %908 = vmatpush2.msra.mxu0 0.0
        %909 = vmatprep.subr.mxu0 0.0
        %910 = vmatpush2.msra.mxu0 0.0
        %911 = vmatprep.subr.mxu0 0.0
        %912 = vmatpush2.msra.mxu0 0.0
        %913 = vmatprep.subr.mxu0 0.0
        %914 = vmatpush2.msra.mxu0 0.0
        %915 = vmatprep.subr.mxu0 0.0
        %916 = vmatpush2.msra.mxu0 0.0
        %917 = vmatprep.subr.mxu0 0.0
        %918 = vmatpush2.msra.mxu0 0.0
        %919 = vmatprep.subr.mxu0 0.0
        %920 = vmatpush2.msra.mxu0 0.0
        %921 = vmatprep.subr.mxu0 0.0
        %922 = vmatpush2.msra.mxu0 0.0
        %923 = vmatprep.subr.mxu0 0.0
        %924 = vmatpush2.msra.mxu0 0.0
        %925 = vmatprep.mubr.f32.mxu0 0.0
        %926 = vmatmul.mubr.f32.gmra.mxu0 %v857
        %v927 = vpop.f32.mrf.mxu0
        %v928 = vadd.f32 %v847, %v927
        %v929 = vpop.f32.mrf.mxu0
        %v930 = vadd.f32 %v849, %v929
        %931 = vmatprep.mubr.f32.mxu0 0.0
        %932 = vmatmul.mubr.f32.gmra.mxu0 %v859
        %v933 = vpop.f32.mrf.mxu0
        %v934 = vadd.f32 %v853, %v933
        %v935 = vpop.f32.mrf.mxu0
        %v936 = vadd.f32 %v855, %v935
        %937 = vdwg.mxu0
        %938 = vset.pattern.permute.xlu0 20
        %939 = vperm.xlu0 %938, %v410
        %v940 = vpop.permute.xlu0 %939
        %941 = vset.pattern.permute.xlu0 20
        %942 = vperm.xlu0 %941, %v411
        %v943 = vpop.permute.xlu0 %942
        %v944 = vrot.slane %v940, 2
        %v945 = vrot.slane %v943, 2
        %v946 = vsel %vm762, %v944, %v945
        %v949 = vadd.f32 %v928, %v946
        %v950 = vadd.f32 %v930, %v946
        %v951 = vadd.f32 %v934, %v945
        %v952 = vadd.f32 %v936, %v945
        %v953 = vmax.f32 %v949, 0.0
        %v954 = vmax.f32 %v950, 0.0
        %v955 = vmax.f32 %v951, 0.0
        %v956 = vmax.f32 %v952, 0.0
        %957 = vst [vmem:[%s408] sm:$0xff] %v953
        %958 = vst [vmem:[%s408 + $0x8] sm:$0xff] %v954
        %959 = vst [vmem:[%s408 + $0x10] sm:$0x3] %v955
        %960 = vst [vmem:[%s408 + $0x18] sm:$0x3] %v956
        %v961 = vcombine.high %v736, %v736
        %v963 = vunpack.c.l.s4 1966171168
        %v964 = vunpack.c.0.s8 %v963
        %v965 = vlaneseq
        %v966 = vshrl.u32 %v965, 7
        %v967 = vsub.s32 %v964, %v966
        %v968 = vrot.slane %v961, %v967
        %v970 = vmul.f32 %v416, %v968
        %v972 = vlaneseq
        %v973 = vshrl.u32 %v972, 7
        %v974 = vsub.s32 0, %v973
        %v975 = vrot.slane %v970, %v974
        %v976 = vlaneseq
        %v977 = vshrl.u32 %v976, 7
        %v978 = vsub.s32 1, %v977
        %v979 = vrot.slane %v970, %v978
        %v982 = vmul.f32 %v412, %v975
        %v983 = vmul.f32 %v413, %v979
        %v984 = vmul.f32 %v414, %v975
        %v985 = vmul.f32 %v415, %v979
        %v987 = vsel %vm431, %v984, 0
        %v990 = vsel %vm431, %v985, 0
        %992 = vmatprep.subr.mxu0 0.0
        %993 = vmatpush1.msra.mxu0 0.0
        %994 = vmatprep.subr.mxu0 0.0
        %995 = vmatpush1.msra.mxu0 0.0
        %996 = vmatprep.subr.mxu0 0.0
        %997 = vmatpush1.msra.mxu0 0.0
        %998 = vmatprep.subr.mxu0 0.0
        %999 = vmatpush1.msra.mxu0 0.0
        %1000 = vmatprep.subr.mxu0 0.0
        %1001 = vmatpush1.msra.mxu0 0.0
        %1002 = vmatprep.subr.mxu0 0.0
        %1003 = vmatpush1.msra.mxu0 0.0
        %1004 = vmatprep.subr.mxu0 0.0
        %1005 = vmatpush1.msra.mxu0 0.0
        %1006 = vmatprep.subr.mxu0 0.0
        %1007 = vmatpush1.msra.mxu0 0.0
        %1008 = vmatprep.subr.mxu0 0.0
        %1009 = vmatpush1.msra.mxu0 0.0
        %1010 = vmatprep.subr.mxu0 0.0
        %1011 = vmatpush1.msra.mxu0 0.0
        %1012 = vmatprep.subr.mxu0 0.0
        %1013 = vmatpush1.msra.mxu0 0.0
        %1014 = vmatprep.subr.mxu0 0.0
        %1015 = vmatpush1.msra.mxu0 0.0
        %1016 = vmatprep.subr.mxu0 0.0
        %1017 = vmatpush1.msra.mxu0 0.0
        %1018 = vmatprep.subr.mxu0 0.0
        %1019 = vmatpush1.msra.mxu0 0.0
        %1020 = vmatprep.subr.mxu0 %v990
        %1021 = vmatpush1.msra.mxu0 %v987
        %1022 = vmatprep.subr.mxu0 %v983
        %1023 = vmatpush1.msra.mxu0 %v982
        %1024 = vmatprep.subr.mxu0 0.0
        %1025 = vmatpush2.msra.mxu0 0.0
        %1026 = vmatprep.subr.mxu0 0.0
        %1027 = vmatpush2.msra.mxu0 0.0
        %1028 = vmatprep.subr.mxu0 0.0
        %1029 = vmatpush2.msra.mxu0 0.0
        %1030 = vmatprep.subr.mxu0 0.0
        %1031 = vmatpush2.msra.mxu0 0.0
        %1032 = vmatprep.subr.mxu0 0.0
        %1033 = vmatpush2.msra.mxu0 0.0
        %1034 = vmatprep.subr.mxu0 0.0
        %1035 = vmatpush2.msra.mxu0 0.0
        %1036 = vmatprep.subr.mxu0 0.0
        %1037 = vmatpush2.msra.mxu0 0.0
        %1038 = vmatprep.subr.mxu0 0.0
        %1039 = vmatpush2.msra.mxu0 0.0
        %1040 = vmatprep.subr.mxu0 0.0
        %1041 = vmatpush2.msra.mxu0 0.0
        %1042 = vmatprep.subr.mxu0 0.0
        %1043 = vmatpush2.msra.mxu0 0.0
        %1044 = vmatprep.subr.mxu0 0.0
        %1045 = vmatpush2.msra.mxu0 0.0
        %1046 = vmatprep.subr.mxu0 0.0
        %1047 = vmatpush2.msra.mxu0 0.0
        %1048 = vmatprep.subr.mxu0 0.0
        %1049 = vmatpush2.msra.mxu0 0.0
        %1050 = vmatprep.subr.mxu0 0.0
        %1051 = vmatpush2.msra.mxu0 0.0
        %1052 = vmatprep.subr.mxu0 0.0
        %1053 = vmatpush2.msra.mxu0 0.0
        %1054 = vmatprep.subr.mxu0 0.0
        %1055 = vmatpush2.msra.mxu0 0.0
        %1056 = vmatprep.mubr.f32.mxu0 0.0
        %1057 = vmatmul.mubr.f32.gmra.mxu0 %v770
        %v1058 = vpop.f32.mrf.mxu0
        %v1059 = vadd.f32 0.0, %v1058
        %v1060 = vpop.f32.mrf.mxu0
        %v1061 = vadd.f32 0.0, %v1060
        %1062 = vmatprep.mubr.f32.mxu0 0.0
        %1063 = vmatmul.mubr.f32.gmra.mxu0 %v772
        %v1064 = vpop.f32.mrf.mxu0
        %v1065 = vadd.f32 0.0, %v1064
        %v1066 = vpop.f32.mrf.mxu0
        %v1067 = vadd.f32 0.0, %v1066
        %1068 = vdwg.mxu0
        %1069 = vmatprep.subr.mxu0 0.0
        %1070 = vmatpush1.msra.mxu0 0.0
        %1071 = vmatprep.subr.mxu0 0.0
        %1072 = vmatpush1.msra.mxu0 0.0
        %1073 = vmatprep.subr.mxu0 0.0
        %1074 = vmatpush1.msra.mxu0 0.0
        %1075 = vmatprep.subr.mxu0 0.0
        %1076 = vmatpush1.msra.mxu0 0.0
        %1077 = vmatprep.subr.mxu0 0.0
        %1078 = vmatpush1.msra.mxu0 0.0
        %1079 = vmatprep.subr.mxu0 0.0
        %1080 = vmatpush1.msra.mxu0 0.0
        %1081 = vmatprep.subr.mxu0 0.0
        %1082 = vmatpush1.msra.mxu0 0.0
        %1083 = vmatprep.subr.mxu0 0.0
        %1084 = vmatpush1.msra.mxu0 0.0
        %1085 = vmatprep.subr.mxu0 0.0
        %1086 = vmatpush1.msra.mxu0 0.0
        %1087 = vmatprep.subr.mxu0 0.0
        %1088 = vmatpush1.msra.mxu0 0.0
        %1089 = vmatprep.subr.mxu0 0.0
        %1090 = vmatpush1.msra.mxu0 0.0
        %1091 = vmatprep.subr.mxu0 0.0
        %1092 = vmatpush1.msra.mxu0 0.0
        %1093 = vmatprep.subr.mxu0 0.0
        %1094 = vmatpush1.msra.mxu0 0.0
        %1095 = vmatprep.subr.mxu0 0.0
        %1096 = vmatpush1.msra.mxu0 0.0
        %1097 = vmatprep.subr.mxu0 %v596
        %1098 = vmatpush1.msra.mxu0 %v593
        %1099 = vmatprep.subr.mxu0 %v422
        %1100 = vmatpush1.msra.mxu0 %v421
        %1101 = vmatprep.subr.mxu0 0.0
        %1102 = vmatpush2.msra.mxu0 0.0
        %1103 = vmatprep.subr.mxu0 0.0
        %1104 = vmatpush2.msra.mxu0 0.0
        %1105 = vmatprep.subr.mxu0 0.0
        %1106 = vmatpush2.msra.mxu0 0.0
        %1107 = vmatprep.subr.mxu0 0.0
        %1108 = vmatpush2.msra.mxu0 0.0
        %1109 = vmatprep.subr.mxu0 0.0
        %1110 = vmatpush2.msra.mxu0 0.0
        %1111 = vmatprep.subr.mxu0 0.0
        %1112 = vmatpush2.msra.mxu0 0.0
        %1113 = vmatprep.subr.mxu0 0.0
        %1114 = vmatpush2.msra.mxu0 0.0
        %1115 = vmatprep.subr.mxu0 0.0
        %1116 = vmatpush2.msra.mxu0 0.0
        %1117 = vmatprep.subr.mxu0 0.0
        %1118 = vmatpush2.msra.mxu0 0.0
        %1119 = vmatprep.subr.mxu0 0.0
        %1120 = vmatpush2.msra.mxu0 0.0
        %1121 = vmatprep.subr.mxu0 0.0
        %1122 = vmatpush2.msra.mxu0 0.0
        %1123 = vmatprep.subr.mxu0 0.0
        %1124 = vmatpush2.msra.mxu0 0.0
        %1125 = vmatprep.subr.mxu0 0.0
        %1126 = vmatpush2.msra.mxu0 0.0
        %1127 = vmatprep.subr.mxu0 0.0
        %1128 = vmatpush2.msra.mxu0 0.0
        %1129 = vmatprep.subr.mxu0 0.0
        %1130 = vmatpush2.msra.mxu0 0.0
        %1131 = vmatprep.subr.mxu0 0.0
        %1132 = vmatpush2.msra.mxu0 0.0
        %1133 = vmatprep.mubr.f32.mxu0 0.0
        %1134 = vmatmul.mubr.f32.gmra.mxu0 %v857
        %v1135 = vpop.f32.mrf.mxu0
        %v1136 = vadd.f32 %v1059, %v1135
        %v1137 = vpop.f32.mrf.mxu0
        %v1138 = vadd.f32 %v1061, %v1137
        %1139 = vmatprep.mubr.f32.mxu0 0.0
        %1140 = vmatmul.mubr.f32.gmra.mxu0 %v859
        %v1141 = vpop.f32.mrf.mxu0
        %v1142 = vadd.f32 %v1065, %v1141
        %v1143 = vpop.f32.mrf.mxu0
        %v1144 = vadd.f32 %v1067, %v1143
        %1145 = vdwg.mxu0
        %v1146 = vadd.f32 %v1136, %v946
        %v1147 = vadd.f32 %v1138, %v946
        %v1148 = vadd.f32 %v1142, %v945
        %v1149 = vadd.f32 %v1144, %v945
        %v1150 = vmax.f32 %v1146, 0.0
        %v1151 = vmax.f32 %v1147, 0.0
        %v1152 = vmax.f32 %v1148, 0.0
        %v1153 = vmax.f32 %v1149, 0.0
        %s1154 = scalar_lea.vmem %s408, 32
        %1155 = vst [vmem:[%s1154] sm:$0xff] %v1150
        %1156 = vst [vmem:[%s1154 + $0x8] sm:$0xff] %v1151
        %1157 = vst [vmem:[%s1154 + $0x10] sm:$0x3] %v1152
        %1158 = vst [vmem:[%s1154 + $0x18] sm:$0x3] %v1153
        %s1159 = sand.u32 %s176, 1
        %s1160 = scalar_lea.sflag [#allocation3], %s1159
        %s1161 = sand.u32 %s176, 1
        %s1162 = smul.addr %s1161, 4
        %s1163 = scalar_lea.vmem [#allocation2], %s1162
        %s1164 = smul.u32 2, %s26
        %p1165 = scmp.lt.s32.totalorder %s25, 1
        %s1166 = scalar_select %p1165, %s25, 1
        %p1167 = scmp.lt.s32.totalorder %s1164, 1
        %s1168 = scalar_select %p1167, %s1164, 1
        %s1169 = smul.addr %s1166, 8
        %s1170 = sadd.s32 %s1168, %s1169
        %s1171 = smul.addr %s1170, 8
        %s1172 = scalar_lea.vmem %s6, %s1171
        // Predicated region
        $region41: #{tpu_custom_call.1} parent=39 // pred_check
          %p1173 = pneg %p186
        $region42: #{tpu_custom_call.1} parent=39 // pred_check_branch
          %1175 = sbr.rel (%p1173) target = $region44
        $region43: #{tpu_custom_call.1} parent=39 // pred_region
          %s1176 = smul.u32 2, %s26
          %s1178 = ssub.s32 64, 64
          %1179 = vsyncadd %s1160, %s1178
          %s1180 = smul.addr %s25, 2
          %s1181 = sadd.s32 %s1176, %s1180
          %s1182 = smul.addr %s1181, 32
          %s1183 = scalar_lea.hbm %s5, %s1182
          %s1185 = sshll.u32 %s1163, 4
          %s1186 = int_to_ptr.vmem [resolvable:$true] %s1185
          %1188 = dma.vmem_to_hbm [thread:$0]  %s1186, 64, %s1183, %s1160
        $region44: #{tpu_custom_call.1} parent=39 // pred_fallthru
          _
        // Predicated region
        $region45: #{tpu_custom_call.1} parent=39 // pred_check
          %p1189 = pneg %p214
        $region46: #{tpu_custom_call.1} parent=39 // pred_check_branch
          %1191 = sbr.rel (%p1189) target = $region48
        $region47: #{tpu_custom_call.1} parent=39 // pred_region
          %s1192 = smul.u32 2, %s26
        $region48: #{tpu_custom_call.1} parent=39 // pred_fallthru
          _
      $region40: #{tpu_custom_call.1} parent=5 // pred_fallthru
        _
      %p1193 = scmp.le.s32.totalorder 2, %s16
      // Predicated region
      $region49: #{tpu_custom_call.1} parent=5 // pred_check
        %p1194 = pneg %p1193
      $region50: #{tpu_custom_call.1} parent=5 // pred_check_branch
        %1196 = sbr.rel (%p1194) target = $region52
      $region51: #{tpu_custom_call.1} parent=5 // pred_region
        %s1197 = ssub.s32 %s16, 2
        // Predicated region
        $region53: #{tpu_custom_call.1} parent=51 // pred_check
          %p1198 = pneg %p192
        $region54: #{tpu_custom_call.1} parent=51 // pred_check_branch
          %1200 = sbr.rel (%p1198) target = $region56
        $region55: #{tpu_custom_call.1} parent=51 // pred_region
          %s1201 = sand.u32 %s177, 1
          %s1202 = scalar_lea.sflag [#allocation3], %s1201
          %s1203 = sand.u32 %s177, 1
          %s1204 = smul.addr %s1203, 4
          %s1205 = scalar_lea.vmem [#allocation2], %s1204
          %1206 = dma.done %s1202, 64
        $region56: #{tpu_custom_call.1} parent=51 // pred_fallthru
          _
        // Predicated region
        $region57: #{tpu_custom_call.1} parent=51 // pred_check
          %p1207 = pneg %p220
        $region58: #{tpu_custom_call.1} parent=51 // pred_check_branch
          %1209 = sbr.rel (%p1207) target = $region60
        $region59: #{tpu_custom_call.1} parent=51 // pred_region
          %s1210 = smul.u32 2, %s28
          %p1211 = scmp.lt.s32.totalorder %s27, 1
          %s1212 = scalar_select %p1211, %s27, 1
          %p1213 = scmp.lt.s32.totalorder %s1210, 1
          %s1214 = scalar_select %p1213, %s1210, 1
          %s1215 = smul.addr %s1212, 8
          %s1216 = sadd.s32 %s1214, %s1215
          %s1217 = smul.addr %s1216, 8
          %s1218 = scalar_lea.vmem %s6, %s1217
        $region60: #{tpu_custom_call.1} parent=51 // pred_fallthru
          _
      $region52: #{tpu_custom_call.1} parent=5 // pred_fallthru
        _
    $region6: #{tpu_custom_call.1} parent=1 // loop_footer
      %s20 = sadd.s32 1, %s16
    $region7: #{tpu_custom_call.1} parent=1 // loop_footer_branch
      %15 = sbr.rel target = $region3
    $region8: #{tpu_custom_call.1} parent=1 // loop_exit
      _
    %1219 = vsyncpa [#allocation3], 1
    %s1220 = scalar_lea.sflag [#allocation3], 1
    %1221 = vsyncpa %s1220, 1

</llo_original>
